<compile_context>
chip_gen: v7x
topology: tpu7x:2x2x1
jax: 0.10.0
libtpu: 0.0.40
codegen_flags: <defaults>
</compile_context>

<pallas_src>
import math

import jax
import jax.numpy as jnp
from jax.experimental import pallas as pl
from jax.experimental.pallas import tpu as pltpu

# sigmoid(-40) ~= 4.2e-18 in f32; with y_true == 0 both focal terms are exactly 0,
# so this is a neutral padding value for the fused-reduction path.
_PAD_LOGIT = -40.0


def _int_pow(x, gamma):
    """x**gamma, specialized to repeated multiplies for small non-negative integer gamma."""
    g = float(gamma)
    if g == int(g) and 0 <= int(g) <= 8:
        n = int(g)
        if n == 0:
            return jnp.ones_like(x)
        y = x
        for _ in range(n - 1):
            y = y * x
        return y
    return jnp.power(x, g)


def _focal_tile(y_pred, y_true, gamma, pos_weight):
    """Elementwise focal loss on one tile, matching the PyTorch forward exactly."""
    y_pred = y_pred.astype(jnp.float32)
    y_true = y_true.astype(jnp.float32)

    p = jax.nn.sigmoid(y_pred)
    one_minus_p = 1.0 - p

    # Match torch .clamp(min=1e-8) exactly.
    # TODO(synk): on v7x (3.2 TB/s HBM) this body may become EUP-bound; a log-sigmoid
    # rewrite reusing a single exp() would cut EUP ops/elem, but deviates from the
    # clamp(1e-8) form for |logit| >~ 18, so it is intentionally not applied here.
    log_p = jnp.log(jnp.maximum(p, 1e-8))
    log_1mp = jnp.log(jnp.maximum(one_minus_p, 1e-8))

    focal_pos = (-pos_weight) * _int_pow(one_minus_p, gamma) * y_true * log_p
    focal_neg = -_int_pow(p, gamma) * (1.0 - y_true) * log_1mp
    return focal_pos + focal_neg


def _elementwise_kernel(gamma, pos_weight):
    def kernel(y_pred_ref, y_true_ref, out_ref):
        out_ref[...] = _focal_tile(
            y_pred_ref[...], y_true_ref[...], gamma, pos_weight
        ).astype(out_ref.dtype)
    return kernel


def _sum_kernel(gamma, pos_weight):
    def kernel(y_pred_ref, y_true_ref, out_ref):
        @pl.when(pl.program_id(0) == 0)
        def _():
            out_ref[...] = jnp.zeros_like(out_ref)
        loss = _focal_tile(y_pred_ref[...], y_true_ref[...], gamma, pos_weight)
        out_ref[...] += jnp.sum(loss)
    return kernel


def _layout(total, lanes, max_tile_rows, exact_blocks):
    """Pick (lanes, tile_rows, padded_rows, fast) for a lane-dense (rows, lanes) retiling.

    fast == True  -> input can be passed as a pure-view reshape (no pad / no slice).
    exact_blocks  -> every block must contain only real-or-neutral data (reduction path),
                     so rows are padded up to a multiple of tile_rows.
    """
    fast_lanes = None
    for c in dict.fromkeys((lanes, 512, 256, 128)):
        if c % 128 == 0 and total % c == 0 and (total // c) % 8 == 0:
            fast_lanes = c
            break

    if fast_lanes is not None:
        lanes = fast_lanes
        rows = total // lanes
    else:
        rows = ((pl.cdiv(total, lanes) + 7) // 8) * 8  # pad rows to a sublane multiple

    tile_rows = min(max_tile_rows, rows)
    if rows > 8 and pl.cdiv(rows, tile_rows) < 2:
        # v7x has 2 TensorCores: give the "parallel" grid axis >= 2 steps when possible.
        tile_rows = max(8, ((pl.cdiv(rows, 2) + 7) // 8) * 8)

    padded_rows = rows
    if exact_blocks:
        padded_rows = pl.cdiv(rows, tile_rows) * tile_rows

    fast = (fast_lanes is not None) and (padded_rows * lanes == total)
    return lanes, tile_rows, padded_rows, fast


def focal_loss(y_pred, y_true, *, gamma=2.0, pos_weight=1.5, reduction="none",
               lanes=512, max_tile_rows=2048, labels_bf16=None):
    """Binary focal loss.

    reduction="none" returns an array of the same shape as y_pred (matches the
    PyTorch module); "sum"/"mean" fuse the reduction into the kernel and return a
    scalar (skips the entire output stream).
    """
    assert y_pred.shape == y_true.shape
    assert lanes % 128 == 0
    assert reduction in ("none", "sum", "mean")

    orig_shape = y_pred.shape
    out_dtype = y_pred.dtype
    total = int(math.prod(orig_shape)) if orig_shape else 1

    # Guarded bf16 label cast: exact for bool/integer (hard 0/1) labels; float
    # (possibly soft) labels only when explicitly requested.
    if labels_bf16 is None:
        labels_bf16 = (jnp.issubdtype(y_true.dtype, jnp.integer)
                       or jnp.issubdtype(y_true.dtype, jnp.bool_))
    if labels_bf16:
        y_true = y_true.astype(jnp.bfloat16)

    reduce = reduction != "none"
    lanes, tile_rows, padded_rows, fast = _layout(total, lanes, max_tile_rows, reduce)
    padded_total = padded_rows * lanes

    if fast:
        yp = y_pred.reshape(padded_rows, lanes)
        yt = y_true.reshape(padded_rows, lanes)
    else:
        pad = padded_total - total
        yp = jnp.pad(y_pred.reshape(-1), (0, pad),
                     constant_values=_PAD_LOGIT).reshape(padded_rows, lanes)
        yt = jnp.pad(y_true.reshape(-1), (0, pad),
                     constant_values=0).reshape(padded_rows, lanes)

    grid = (pl.cdiv(padded_rows, tile_rows),)
    blk = pl.BlockSpec((tile_rows, lanes), lambda i: (i, 0))
    in_bytes = (yp.dtype.itemsize + yt.dtype.itemsize) * padded_total

    if reduce:
        out = pl.pallas_call(
            _sum_kernel(float(gamma), float(pos_weight)),
            out_shape=jax.ShapeDtypeStruct((1, 1), jnp.float32),
            grid_spec=pltpu.PrefetchScalarGridSpec(
                num_scalar_prefetch=0,
                grid=grid,
                in_specs=[blk, blk],
                out_specs=pl.BlockSpec((1, 1), lambda i: (0, 0)),
            ),
            compiler_params=pltpu.CompilerParams(
                dimension_semantics=("arbitrary",),
                vmem_limit_bytes=48 << 20,
            ),
            cost_estimate=pl.CostEstimate(
                flops=12 * padded_total,
                transcendentals=3 * padded_total,
                bytes_accessed=in_bytes + 4,
            ),
        )(yp, yt)
        s = out[0, 0]
        if reduction == "mean":
            s = s / jnp.float32(total)
        return s

    out = pl.pallas_call(
        _elementwise_kernel(float(gamma), float(pos_weight)),
        out_shape=jax.ShapeDtypeStruct((padded_rows, lanes), out_dtype),
        grid_spec=pltpu.PrefetchScalarGridSpec(
            num_scalar_prefetch=0,
            grid=grid,
            in_specs=[blk, blk],
            out_specs=blk,
        ),
        compiler_params=pltpu.CompilerParams(
            dimension_semantics=("parallel",),
            vmem_limit_bytes=48 << 20,
        ),
        cost_estimate=pl.CostEstimate(
            flops=10 * padded_total,
            transcendentals=3 * padded_total,
            bytes_accessed=in_bytes + jnp.dtype(out_dtype).itemsize * padded_total,
        ),
    )(yp, yt)

    if fast:
        return out.reshape(orig_shape)
    return out.reshape(-1)[:total].reshape(orig_shape)


def focal_loss_ref(y_pred, y_true, gamma=2.0, pos_weight=1.5):
    """Pure-JAX reference mirroring the PyTorch forward exactly."""
    p = jax.nn.sigmoid(y_pred)
    pos = -pos_weight * (1.0 - p) ** gamma * y_true * jnp.log(jnp.maximum(p, 1e-8))
    neg = -(p ** gamma) * (1.0 - y_true) * jnp.log(jnp.maximum(1.0 - p, 1e-8))
    return pos + neg


if __name__ == "__main__":
    key = jax.random.PRNGKey(0)
    k1, k2, k3, k4, k5, k6 = jax.random.split(key, 6)
    gamma, pos_weight = 2.0, 1.5

    # 1) Typical shape: batch=16 examples x 128 binary labels (fast path, no pad/slice copies).
    batch, num_labels = 16, 128
    y_pred = jax.random.normal(k1, (batch, num_labels), dtype=jnp.float32) * 3.0
    y_true = (jax.random.uniform(k2, (batch, num_labels)) > 0.5).astype(jnp.float32)
    out = jax.block_until_ready(
        focal_loss(y_pred, y_true, gamma=gamma, pos_weight=pos_weight))
    ref = focal_loss_ref(y_pred, y_true, gamma=gamma, pos_weight=pos_weight)
    assert out.shape == (batch, num_labels)
    assert jnp.allclose(out, ref, atol=1e-5, rtol=1e-5), "mismatch vs reference"

    # 2) Odd / non-divisible shape exercises the padding path.
    y_pred2 = jax.random.normal(k3, (7, 37), dtype=jnp.float32) * 3.0
    y_true2 = (jax.random.uniform(k4, (7, 37)) > 0.5).astype(jnp.float32)
    out2 = jax.block_until_ready(
        focal_loss(y_pred2, y_true2, gamma=gamma, pos_weight=pos_weight))
    ref2 = focal_loss_ref(y_pred2, y_true2, gamma=gamma, pos_weight=pos_weight)
    assert out2.shape == (7, 37)
    assert jnp.allclose(out2, ref2, atol=1e-5, rtol=1e-5), "mismatch (odd shape)"

    # 3) Integer hard labels -> auto bf16 label cast (exact for 0/1).
    y_true_i = (jax.random.uniform(k5, (batch, num_labels)) > 0.5).astype(jnp.int32)
    out3 = jax.block_until_ready(
        focal_loss(y_pred, y_true_i, gamma=gamma, pos_weight=pos_weight))
    ref3 = focal_loss_ref(y_pred, y_true_i.astype(jnp.float32), gamma=gamma, pos_weight=pos_weight)
    assert jnp.allclose(out3, ref3, atol=1e-5, rtol=1e-5), "mismatch (int labels)"

    # 4) Multi-step grid (>=2 blocks, v7x dual-TensorCore path) + forced bf16 labels.
    y_pred4 = jax.random.normal(k6, (32, 1024), dtype=jnp.float32) * 3.0
    y_true4 = (jax.random.uniform(k2, (32, 1024)) > 0.5).astype(jnp.float32)
    out4 = jax.block_until_ready(
        focal_loss(y_pred4, y_true4, gamma=gamma, pos_weight=pos_weight, labels_bf16=True))
    ref4 = focal_loss_ref(y_pred4, y_true4, gamma=gamma, pos_weight=pos_weight)
    assert jnp.allclose(out4, ref4, atol=1e-5, rtol=1e-5), "mismatch (multi-block / bf16 labels)"

    # 5) Extreme logits hit the 1e-8 clamp on both branches.
    y_pred5 = jnp.array([[-50., -20., -5., 0., 5., 20., 50., 3.]], dtype=jnp.float32)
    y_true5 = jnp.array([[1., 0., 1., 0., 1., 0., 1., 0.]], dtype=jnp.float32)
    out5 = jax.block_until_ready(
        focal_loss(y_pred5, y_true5, gamma=gamma, pos_weight=pos_weight))
    ref5 = focal_loss_ref(y_pred5, y_true5, gamma=gamma, pos_weight=pos_weight)
    assert jnp.allclose(out5, ref5, atol=1e-5, rtol=1e-5), "mismatch (extreme logits)"

    # 6) Fused reductions (skip the elementwise output stream entirely).
    s_sum = jax.block_until_ready(
        focal_loss(y_pred, y_true, gamma=gamma, pos_weight=pos_weight, reduction="sum"))
    s_mean = jax.block_until_ready(
        focal_loss(y_pred2, y_true2, gamma=gamma, pos_weight=pos_weight, reduction="mean"))
    assert jnp.allclose(s_sum, jnp.sum(ref), atol=1e-2, rtol=1e-4), "mismatch (fused sum)"
    assert jnp.allclose(s_mean, jnp.mean(ref2), atol=1e-4, rtol=1e-4), "mismatch (fused mean)"

    print("KERNEL_OK")
</pallas_src>

<mosaic_0001>
module attributes {stable_mosaic.version = 11 : i64} {
  func.func @kernel(%arg0: i32, %arg1: memref<8x256xf32, #tpu.memory_space<vmem>>, %arg2: memref<8x256xf32, #tpu.memory_space<vmem>>, %arg3: memref<8x256xf32, #tpu.memory_space<vmem>>) attributes {dimension_semantics = [#tpu.dimension_semantics<parallel>], iteration_bounds = array<i64: 1>, scalar_prefetch = 0 : i64, scratch_operands = 0 : i64, tpu.core_type = #tpu.core_type<tc>, window_params = [{transform_indices = @transform_0, window_bounds = array<i64: 8, 256>}, {transform_indices = @transform_1, window_bounds = array<i64: 8, 256>}, {transform_indices = @transform_2, window_bounds = array<i64: 8, 256>}]} {
    %c0 = arith.constant 0 : index
    %c0_0 = arith.constant 0 : index
    %0 = vector.load %arg1[%c0, %c0_0] : memref<8x256xf32, #tpu.memory_space<vmem>>, vector<8x256xf32>
    %c0_1 = arith.constant 0 : index
    %c0_2 = arith.constant 0 : index
    %1 = vector.load %arg2[%c0_1, %c0_2] : memref<8x256xf32, #tpu.memory_space<vmem>>, vector<8x256xf32>
    %2 = arith.negf %0 : vector<8x256xf32>
    %3 = math.exp %2 : vector<8x256xf32>
    %cst = arith.constant 1.000000e+00 : f32
    %4 = vector.broadcast %cst : f32 to vector<8x256xf32>
    %5 = arith.addf %4, %3 : vector<8x256xf32>
    %6 = arith.divf %4, %5 : vector<8x256xf32>
    %cst_3 = arith.constant 1.000000e+00 : f32
    %7 = vector.broadcast %cst_3 : f32 to vector<8x256xf32>
    %8 = arith.subf %7, %6 : vector<8x256xf32>
    %cst_4 = arith.constant 9.99999993E-9 : f32
    %9 = vector.broadcast %cst_4 : f32 to vector<8x256xf32>
    %10 = arith.maximumf %6, %9 : vector<8x256xf32>
    %11 = math.log %10 : vector<8x256xf32>
    %cst_5 = arith.constant 9.99999993E-9 : f32
    %12 = vector.broadcast %cst_5 : f32 to vector<8x256xf32>
    %13 = arith.maximumf %8, %12 : vector<8x256xf32>
    %14 = math.log %13 : vector<8x256xf32>
    %15 = arith.mulf %8, %8 : vector<8x256xf32>
    %cst_6 = arith.constant -1.500000e+00 : f32
    %16 = vector.broadcast %cst_6 : f32 to vector<8x256xf32>
    %17 = arith.mulf %16, %15 : vector<8x256xf32>
    %18 = arith.mulf %17, %1 : vector<8x256xf32>
    %19 = arith.mulf %18, %11 : vector<8x256xf32>
    %20 = arith.mulf %6, %6 : vector<8x256xf32>
    %cst_7 = arith.constant 0.000000e+00 : f32
    %21 = vector.broadcast %cst_7 : f32 to vector<8x256xf32>
    %22 = arith.subf %21, %20 : vector<8x256xf32>
    %cst_8 = arith.constant 1.000000e+00 : f32
    %23 = vector.broadcast %cst_8 : f32 to vector<8x256xf32>
    %24 = arith.subf %23, %1 : vector<8x256xf32>
    %25 = arith.mulf %22, %24 : vector<8x256xf32>
    %26 = arith.mulf %25, %14 : vector<8x256xf32>
    %27 = arith.addf %19, %26 : vector<8x256xf32>
    %c0_9 = arith.constant 0 : index
    %c0_10 = arith.constant 0 : index
    %28 = vector.load %arg3[%c0_9, %c0_10] : memref<8x256xf32, #tpu.memory_space<vmem>>, vector<8x256xf32>
    tpu.vector_store %arg3[%c0_9, %c0_10], %27 {strides = array<i32>} : memref<8x256xf32, #tpu.memory_space<vmem>>, vector<8x256xf32>,
    return
  }
  func.func @transform_0(%arg0: i32) -> (i32, i32) {
    %c0_i32 = arith.constant 0 : i32
    %c0_i32_0 = arith.constant 0 : i32
    return %arg0, %c0_i32 : i32, i32
  }
  func.func @transform_1(%arg0: i32) -> (i32, i32) {
    %c0_i32 = arith.constant 0 : i32
    %c0_i32_0 = arith.constant 0 : i32
    return %arg0, %c0_i32 : i32, i32
  }
  func.func @transform_2(%arg0: i32) -> (i32, i32) {
    %c0_i32 = arith.constant 0 : i32
    %c0_i32_0 = arith.constant 0 : i32
    return %arg0, %c0_i32 : i32, i32
  }
}

</mosaic_0001>

<llo_original>
// kernel: tpu_custom_call.1
$region0: #{tpu_custom_call.1}
  #allocation0 [shape = 'u32[]', space=smem, size = 0x4, offset = 0x4, fixed_abs, tag = 'smem constant byte address 0x4 - core index']
  #allocation1 [shape = 'u32[144,128]{1,0:T(1,128)}', space=vmem, size = 0x12000, scoped, tag = 'internal scratch']
  %s0 = inlined_call_operand.hbm [shape: f32[8,256], index: 0, kind: input, shape index: {}]
  %s1 = inlined_call_operand.hbm [shape: f32[8,256], index: 1, kind: input, shape index: {}]
  %s2 = inlined_call_operand.hbm [shape: f32[8,256], index: 2, kind: output, shape index: {}]
  %s3 = sld [smem:[#allocation0]]
  $region26: #{tpu_custom_call.1} parent=0
    _
  %s5 = ssub.s32 1, %s3
  %s6 = scalar_select 0, %s5, %s3
  $region1: #{tpu_custom_call.1} parent=0
    #allocation2 [shape = 'u8[8192]{0}', space=vmem, size = 0x2000, scoped, tag = 'input window, operand 0, single buffered']
    #allocation3 [shape = 's32[1]{0}', space=sflag, size = 0x4, scoped, tag = 'scoped memory for tpu_custom_call.1']
    #allocation4 [shape = 's32[1]{0}', space=sflag, size = 0x4, scoped, tag = 'scoped memory for tpu_custom_call.1']
    #allocation5 [shape = 'u8[8192]{0}', space=vmem, size = 0x2000, scoped, tag = 'input window, operand 1, single buffered']
    #allocation6 [shape = 's32[1]{0}', space=sflag, size = 0x4, scoped, tag = 'scoped memory for tpu_custom_call.1']
    #allocation7 [shape = 'u8[8192]{0}', space=vmem, size = 0x2000, scoped, tag = 'output window, operand 0, single buffered']
    %7 = vsyncpa [#allocation3], 0
    %8 = vsyncpa [#allocation6], 0
    %9 = vsyncpa [#allocation4], 0
    // Predicated region
    $region2: #{tpu_custom_call.1} parent=1 // pred_check
      _
    $region3: #{tpu_custom_call.1} parent=1 // pred_check_branch
      %11 = sbr.rel (0) target = $region5
    $region4: #{tpu_custom_call.1} parent=1 // pred_region
      %s13 = ssub.s32 256, 256
      %14 = vsyncadd [#allocation3], %s13
      %s16 = sshll.u32 [#allocation2], 4
      %s17 = int_to_ptr.vmem [resolvable:$true] %s16
      %19 = dma.hbm_to_vmem [thread:$0]  %s0, 256, %s17, [#allocation3]
    $region5: #{tpu_custom_call.1} parent=1 // pred_fallthru
      _
    // Predicated region
    $region6: #{tpu_custom_call.1} parent=1 // pred_check
      _
    $region7: #{tpu_custom_call.1} parent=1 // pred_check_branch
      %21 = sbr.rel (0) target = $region9
    $region8: #{tpu_custom_call.1} parent=1 // pred_region
      %s23 = ssub.s32 256, 256
      %24 = vsyncadd [#allocation6], %s23
      %s26 = sshll.u32 [#allocation5], 4
      %s27 = int_to_ptr.vmem [resolvable:$true] %s26
      %29 = dma.hbm_to_vmem [thread:$0]  %s1, 256, %s27, [#allocation6]
    $region9: #{tpu_custom_call.1} parent=1 // pred_fallthru
      _
    // Predicated region
    $region10: #{tpu_custom_call.1} parent=1 // pred_check
      _
    $region11: #{tpu_custom_call.1} parent=1 // pred_check_branch
      %31 = sbr.rel (0) target = $region13
    $region12: #{tpu_custom_call.1} parent=1 // pred_region
      %32 = dma.done [#allocation3], 256
    $region13: #{tpu_custom_call.1} parent=1 // pred_fallthru
      _
    // Predicated region
    $region14: #{tpu_custom_call.1} parent=1 // pred_check
      _
    $region15: #{tpu_custom_call.1} parent=1 // pred_check_branch
      %34 = sbr.rel (0) target = $region17
    $region16: #{tpu_custom_call.1} parent=1 // pred_region
      %35 = dma.done [#allocation6], 256
    $region17: #{tpu_custom_call.1} parent=1 // pred_fallthru
      _
    %v36 = vld [vmem:[#allocation2] sm:$0xff]
    %v37 = vld [vmem:[#allocation2 + $0x8] sm:$0xff]
    %v38 = vld [vmem:[#allocation5] sm:$0xff]
    %v39 = vld [vmem:[#allocation5 + $0x8] sm:$0xff]
    %v40 = vxor.u32 %v36, 2147483648
    %v41 = vxor.u32 %v37, 2147483648
    %v42 = vmul.f32 %v40, 1.442695
    %v43 = vpow.pop %v42
    %v44 = vmul.f32 %v41, 1.442695
    %v45 = vpow.pop %v44
    %v46 = vadd.f32 %v43, 1.0
    %v47 = vadd.f32 %v45, 1.0
    %v48 = vrcp.pop %v46
    %v49 = vmul.f32 1.0, %v48
    %v50 = vrcp.pop %v47
    %v51 = vmul.f32 1.0, %v50
    %v52 = vsub.f32 1.0, %v49
    %v53 = vsub.f32 1.0, %v51
    %v54 = vmax.f32 %v49, 1e-08
    %v55 = vmax.f32 %v51, 1e-08
    %v56 = vlog2.pop %v54
    %v57 = vmul.f32 %v56, 0.6931472
    %v58 = vlog2.pop %v55
    %v59 = vmul.f32 %v58, 0.6931472
    %v60 = vmax.f32 %v52, 1e-08
    %v61 = vmax.f32 %v53, 1e-08
    %v62 = vlog2.pop %v60
    %v63 = vmul.f32 %v62, 0.6931472
    %v64 = vlog2.pop %v61
    %v65 = vmul.f32 %v64, 0.6931472
    %v66 = vmul.f32 %v52, %v52
    %v67 = vmul.f32 %v53, %v53
    %v68 = vmul.f32 %v66, -1.5
    %v69 = vmul.f32 %v67, -1.5
    %v70 = vmul.f32 %v68, %v38
    %v71 = vmul.f32 %v69, %v39
    %v72 = vmul.f32 %v70, %v57
    %v73 = vmul.f32 %v71, %v59
    %v74 = vmul.f32 %v49, %v49
    %v75 = vmul.f32 %v51, %v51
    %v76 = vsub.f32 0.0, %v74
    %v77 = vsub.f32 0.0, %v75
    %v78 = vsub.f32 1.0, %v38
    %v79 = vsub.f32 1.0, %v39
    %v80 = vmul.f32 %v76, %v78
    %v81 = vmul.f32 %v77, %v79
    %v82 = vmul.f32 %v80, %v63
    %v83 = vmul.f32 %v81, %v65
    %v84 = vadd.f32 %v72, %v82
    %v85 = vadd.f32 %v73, %v83
    %86 = vst [vmem:[#allocation7] sm:$0xff] %v84
    %87 = vst [vmem:[#allocation7 + $0x8] sm:$0xff] %v85
    // Predicated region
    $region18: #{tpu_custom_call.1} parent=1 // pred_check
      _
    $region19: #{tpu_custom_call.1} parent=1 // pred_check_branch
      %89 = sbr.rel (0) target = $region21
    $region20: #{tpu_custom_call.1} parent=1 // pred_region
      %s91 = ssub.s32 256, 256
      %92 = vsyncadd [#allocation4], %s91
      %s94 = sshll.u32 [#allocation7], 4
      %s95 = int_to_ptr.vmem [resolvable:$true] %s94
      %97 = dma.vmem_to_hbm [thread:$0]  %s95, 256, %s2, [#allocation4]
    $region21: #{tpu_custom_call.1} parent=1 // pred_fallthru
      _
    // Predicated region
    $region22: #{tpu_custom_call.1} parent=1 // pred_check
      _
    $region23: #{tpu_custom_call.1} parent=1 // pred_check_branch
      %99 = sbr.rel (0) target = $region25
    $region24: #{tpu_custom_call.1} parent=1 // pred_region
      %100 = dma.done [#allocation4], 256
    $region25: #{tpu_custom_call.1} parent=1 // pred_fallthru
      _
    %101 = vsyncpa [#allocation3], 1
    %102 = vsyncpa [#allocation6], 1
    %103 = vsyncpa [#allocation4], 1

</llo_original>
